<compile_context>
chip_gen: v6e
topology: v6e:2x2x1
jax: 0.10.0
libtpu: 0.0.40
codegen_flags: <defaults>
</compile_context>

<pallas_src>
import jax
import jax.numpy as jnp
from jax import lax
from jax.experimental import pallas as pl
from jax.experimental.pallas import tpu as pltpu


def _make_kernel(leaky_alpha: float):
    def kernel(hq_ref, h_ref, adj_ref, a_ref, o_ref):
        # hq_ref:  (1, TQ, D)  query-row tile of hidden
        # h_ref:   (1, N, D)   full hidden for this batch element (resident)
        # adj_ref: (1, TQ, N)  int8 adjacency-type tile
        # a_ref:   (4, D)      stacked attention vectors a_0..a_3
        # o_ref:   (1, TQ, D)  output tile
        hq = hq_ref[0].astype(jnp.float32)           # (TQ, D)
        h_bf = h_ref[0].astype(jnp.bfloat16)         # (N, D)  MXU operand
        adj = adj_ref[0].astype(jnp.int32)           # (TQ, N) widened once in VMEM
        a = a_ref[...].astype(jnp.float32)           # (4, D)

        tq, _ = hq.shape

        # Fused e-matmul: stack the 4 scaled query tiles -> (4*TQ, D) and do a
        # single MXU matmul contracting D of both operands (transposed-RHS
        # contraction; never materialize h.T).
        scaled = jnp.concatenate([hq * a[k:k + 1, :] for k in range(4)], axis=0)
        e_all = lax.dot_general(
            scaled.astype(jnp.bfloat16), h_bf,
            dimension_numbers=(((1,), (1,)), ((), ())),
            preferred_element_type=jnp.float32,
        )                                            # (4*TQ, N) f32

        # adj-type select chain (no separate neg_mask buffer), then one LeakyReLU.
        neg = jnp.float32(-9e15)
        alpha = jnp.where(adj == 1, e_all[0 * tq:1 * tq, :], neg)
        alpha = jnp.where(adj == 2, e_all[1 * tq:2 * tq, :], alpha)
        alpha = jnp.where(adj == 3, e_all[2 * tq:3 * tq, :], alpha)
        alpha = jnp.where(adj == 4, e_all[3 * tq:4 * tq, :], alpha)
        alpha = jnp.where(alpha > 0, alpha, leaky_alpha * alpha)

        # Row-wise softmax with deferred normalization.
        m = jnp.max(alpha, axis=-1, keepdims=True)   # (TQ, 1)
        p = jnp.exp(alpha - m)                       # (TQ, N) f32
        s = jnp.sum(p, axis=-1, keepdims=True)       # (TQ, 1)
        out = jnp.dot(p.astype(jnp.bfloat16), h_bf,
                      preferred_element_type=jnp.float32)   # (TQ, D)
        out = out * pl.reciprocal(s, approx=True)
        o_ref[0] = out.astype(o_ref.dtype)

    return kernel


def _pick_row_tile(n: int) -> int:
    """Largest convenient row tile dividing N (multiple of 32 when tiling so the
    int8 adj block stays sublane-aligned; full N when N is small)."""
    if n <= 256:
        return n
    for t in (256, 128, 64, 32):
        if n % t == 0:
            return t
    return n


def local_aggregator(hidden, adj, a_stack, *, leaky_alpha, row_tile=None):
    """hidden: (B, N, D) f32, adj: (B, N, N) integer (values 0..4), a_stack: (4, D) f32."""
    B, N, D = hidden.shape
    tq = _pick_row_tile(N) if row_tile is None else row_tile
    assert N % tq == 0, (N, tq)
    adj_i8 = adj.astype(jnp.int8)   # edge-type codes 0..4 fit in int8 -> 4x less DMA

    kernel = _make_kernel(float(leaky_alpha))
    return pl.pallas_call(
        kernel,
        out_shape=jax.ShapeDtypeStruct((B, N, D), hidden.dtype),
        grid_spec=pltpu.PrefetchScalarGridSpec(
            num_scalar_prefetch=0,
            grid=(B, N // tq),
            in_specs=[
                pl.BlockSpec((1, tq, D), lambda b, t: (b, t, 0)),  # query row tile
                pl.BlockSpec((1, N, D), lambda b, t: (b, 0, 0)),   # full h (resident over t)
                pl.BlockSpec((1, tq, N), lambda b, t: (b, t, 0)),  # adj row tile (int8)
                pl.BlockSpec((4, D), lambda b, t: (0, 0)),         # attention vectors
            ],
            out_specs=pl.BlockSpec((1, tq, D), lambda b, t: (b, t, 0)),
        ),
        compiler_params=pltpu.CompilerParams(
            dimension_semantics=("parallel", "parallel"),
            vmem_limit_bytes=48 * 1024 * 1024,
        ),
    )(hidden, hidden, adj_i8, a_stack)
    # TODO(synk): output stays (TQ, D) with D possibly < 128 lanes; a lane-dense
    # packed output layout would further speed up the store epilogue.


def local_aggregator_ref(hidden, adj, a_stack, *, leaky_alpha):
    """Pure-JAX f32 reference mirroring the PyTorch forward, for validation."""
    h = hidden.astype(jnp.float32)
    B, N, D = h.shape
    a_input = h[:, :, None, :] * h[:, None, :, :]                 # (B, N, N, D)
    es = []
    for k in range(4):
        e = jnp.einsum("bijd,d->bij", a_input, a_stack[k])
        e = jnp.where(e > 0, e, leaky_alpha * e)
        es.append(e)
    alpha = jnp.full((B, N, N), -9e15, dtype=jnp.float32)
    for k in range(4):
        alpha = jnp.where(adj == (k + 1), es[k], alpha)
    alpha = jax.nn.softmax(alpha, axis=-1)
    return jnp.einsum("bij,bjd->bid", alpha, h)


if __name__ == "__main__":
    key = jax.random.PRNGKey(0)
    B, N, D = 2, 8, 32
    leaky_alpha = 0.2

    k_h, k_adj, k_a = jax.random.split(key, 3)
    hidden = jax.random.normal(k_h, (B, N, D), dtype=jnp.float32)
    # adjacency-type matrix with values in {0,1,2,3,4}; 0 means "no edge"
    adj = jax.random.randint(k_adj, (B, N, N), 0, 5, dtype=jnp.int32)
    # deterministic parameter init (a_0..a_3 stacked; bias unused in forward)
    a_stack = 0.1 * jax.random.normal(k_a, (4, D), dtype=jnp.float32)
    # TODO(synk): dropout declared in __init__ is never applied in forward; omitted.

    out = local_aggregator(hidden, adj, a_stack, leaky_alpha=leaky_alpha)
    out = jax.block_until_ready(out)

    ref = local_aggregator_ref(hidden, adj, a_stack, leaky_alpha=leaky_alpha)
    assert out.shape == (B, N, D)
    # Tolerance relaxed relative to the pure-f32 reference because the MXU
    # matmuls run with bf16 operands (f32 accumulation).
    assert jnp.allclose(out, ref, atol=5e-2, rtol=5e-2), (
        float(jnp.max(jnp.abs(out - ref))))

    print("KERNEL_OK")
</pallas_src>

<mosaic_0001>
module attributes {stable_mosaic.version = 11 : i64} {
  func.func @kernel(%arg0: i32, %arg1: i32, %arg2: memref<1x8x32xf32, #tpu.memory_space<vmem>>, %arg3: memref<1x8x32xf32, #tpu.memory_space<vmem>>, %arg4: memref<1x8x8xi8, #tpu.memory_space<vmem>>, %arg5: memref<4x32xf32, #tpu.memory_space<vmem>>, %arg6: memref<1x8x32xf32, #tpu.memory_space<vmem>>) attributes {dimension_semantics = [#tpu.dimension_semantics<parallel>, #tpu.dimension_semantics<parallel>], iteration_bounds = array<i64: 2, 1>, scalar_prefetch = 0 : i64, scratch_operands = 0 : i64, tpu.core_type = #tpu.core_type<tc>, window_params = [{transform_indices = @transform_0, window_bounds = array<i64: 1, 8, 32>}, {transform_indices = @transform_1, window_bounds = array<i64: 1, 8, 32>}, {transform_indices = @transform_2, window_bounds = array<i64: 1, 8, 8>}, {pipeline_mode = #tpu.pipeline_mode<synchronous>, transform_indices = @transform_3, window_bounds = array<i64: 4, 32>}, {transform_indices = @transform_4, window_bounds = array<i64: 1, 8, 32>}]} {
    %c0 = arith.constant 0 : index
    %c0_0 = arith.constant 0 : index
    %c0_1 = arith.constant 0 : index
    %0 = vector.load %arg2[%c0, %c0_0, %c0_1] : memref<1x8x32xf32, #tpu.memory_space<vmem>>, vector<1x8x32xf32>
    %1 = vector.shape_cast %0 : vector<1x8x32xf32> to vector<8x32xf32>
    %c0_2 = arith.constant 0 : index
    %c0_3 = arith.constant 0 : index
    %c0_4 = arith.constant 0 : index
    %2 = vector.load %arg3[%c0_2, %c0_3, %c0_4] : memref<1x8x32xf32, #tpu.memory_space<vmem>>, vector<1x8x32xf32>
    %3 = vector.shape_cast %2 : vector<1x8x32xf32> to vector<8x32xf32>
    %4 = arith.truncf %3 : vector<8x32xf32> to vector<8x32xbf16>
    %c0_5 = arith.constant 0 : index
    %c0_6 = arith.constant 0 : index
    %c0_7 = arith.constant 0 : index
    %5 = vector.load %arg4[%c0_5, %c0_6, %c0_7] : memref<1x8x8xi8, #tpu.memory_space<vmem>>, vector<1x8x8xi8>
    %6 = vector.shape_cast %5 : vector<1x8x8xi8> to vector<8x8xi8>
    %7 = arith.extsi %6 : vector<8x8xi8> to vector<8x8xi32>
    %c0_8 = arith.constant 0 : index
    %c0_9 = arith.constant 0 : index
    %8 = vector.load %arg5[%c0_8, %c0_9] : memref<4x32xf32, #tpu.memory_space<vmem>>, vector<4x32xf32>
    %9 = vector.extract_strided_slice %8 {offsets = [0, 0], sizes = [1, 32], strides = [1, 1]} : vector<4x32xf32> to vector<1x32xf32>
    %10 = vector.broadcast %9 : vector<1x32xf32> to vector<8x32xf32>
    %11 = arith.mulf %1, %10 : vector<8x32xf32>
    %12 = vector.extract_strided_slice %8 {offsets = [1, 0], sizes = [1, 32], strides = [1, 1]} : vector<4x32xf32> to vector<1x32xf32>
    %13 = vector.broadcast %12 : vector<1x32xf32> to vector<8x32xf32>
    %14 = arith.mulf %1, %13 : vector<8x32xf32>
    %15 = vector.extract_strided_slice %8 {offsets = [2, 0], sizes = [1, 32], strides = [1, 1]} : vector<4x32xf32> to vector<1x32xf32>
    %16 = vector.broadcast %15 : vector<1x32xf32> to vector<8x32xf32>
    %17 = arith.mulf %1, %16 : vector<8x32xf32>
    %18 = vector.extract_strided_slice %8 {offsets = [3, 0], sizes = [1, 32], strides = [1, 1]} : vector<4x32xf32> to vector<1x32xf32>
    %19 = vector.broadcast %18 : vector<1x32xf32> to vector<8x32xf32>
    %20 = arith.mulf %1, %19 : vector<8x32xf32>
    %21 = tpu.concatenate %11, %14, %17, %20 in 0 : vector<8x32xf32>, vector<8x32xf32>, vector<8x32xf32>, vector<8x32xf32> -> vector<32x32xf32>
    %22 = arith.truncf %21 : vector<32x32xf32> to vector<32x32xbf16>
    %cst = arith.constant dense<0.000000e+00> : vector<32x8xf32>
    %23 = tpu.matmul %22, %4, %cst {dimension_numbers = #tpu.dot_dimension_numbers<[1], [1], [0], [0], [0, 0, 1, 0], [], []>} : vector<32x32xbf16>, vector<8x32xbf16>, vector<32x8xf32> -> vector<32x8xf32>
    %c1_i32 = arith.constant 1 : i32
    %24 = vector.broadcast %c1_i32 : i32 to vector<8x8xi32>
    %25 = arith.cmpi eq, %7, %24 : vector<8x8xi32>
    %26 = vector.extract_strided_slice %23 {offsets = [0, 0], sizes = [8, 8], strides = [1, 1]} : vector<32x8xf32> to vector<8x8xf32>
    %cst_10 = arith.constant -9.000000e+15 : f32
    %27 = vector.broadcast %cst_10 : f32 to vector<8x8xf32>
    %28 = arith.select %25, %26, %27 : vector<8x8xi1>, vector<8x8xf32>
    %c2_i32 = arith.constant 2 : i32
    %29 = vector.broadcast %c2_i32 : i32 to vector<8x8xi32>
    %30 = arith.cmpi eq, %7, %29 : vector<8x8xi32>
    %31 = vector.extract_strided_slice %23 {offsets = [8, 0], sizes = [8, 8], strides = [1, 1]} : vector<32x8xf32> to vector<8x8xf32>
    %32 = arith.select %30, %31, %28 : vector<8x8xi1>, vector<8x8xf32>
    %c3_i32 = arith.constant 3 : i32
    %33 = vector.broadcast %c3_i32 : i32 to vector<8x8xi32>
    %34 = arith.cmpi eq, %7, %33 : vector<8x8xi32>
    %35 = vector.extract_strided_slice %23 {offsets = [16, 0], sizes = [8, 8], strides = [1, 1]} : vector<32x8xf32> to vector<8x8xf32>
    %36 = arith.select %34, %35, %32 : vector<8x8xi1>, vector<8x8xf32>
    %c4_i32 = arith.constant 4 : i32
    %37 = vector.broadcast %c4_i32 : i32 to vector<8x8xi32>
    %38 = arith.cmpi eq, %7, %37 : vector<8x8xi32>
    %39 = vector.extract_strided_slice %23 {offsets = [24, 0], sizes = [8, 8], strides = [1, 1]} : vector<32x8xf32> to vector<8x8xf32>
    %40 = arith.select %38, %39, %36 : vector<8x8xi1>, vector<8x8xf32>
    %cst_11 = arith.constant 0.000000e+00 : f32
    %41 = vector.broadcast %cst_11 : f32 to vector<8x8xf32>
    %42 = arith.cmpf ogt, %40, %41 : vector<8x8xf32>
    %cst_12 = arith.constant 2.000000e-01 : f32
    %43 = vector.broadcast %cst_12 : f32 to vector<8x8xf32>
    %44 = arith.mulf %43, %40 : vector<8x8xf32>
    %45 = arith.select %42, %40, %44 : vector<8x8xi1>, vector<8x8xf32>
    %cst_13 = arith.constant dense<0xFF800000> : vector<8xf32>
    %46 = vector.multi_reduction <maximumf>, %45, %cst_13 [1] : vector<8x8xf32> to vector<8xf32>
    %47 = vector.shape_cast %46 : vector<8xf32> to vector<8x1xf32>
    %48 = vector.broadcast %47 : vector<8x1xf32> to vector<8x8xf32>
    %49 = arith.subf %45, %48 : vector<8x8xf32>
    %50 = math.exp %49 : vector<8x8xf32>
    %cst_14 = arith.constant dense<0.000000e+00> : vector<8xf32>
    %51 = vector.multi_reduction <add>, %50, %cst_14 [1] : vector<8x8xf32> to vector<8xf32>
    %52 = vector.shape_cast %51 : vector<8xf32> to vector<8x1xf32>
    %53 = arith.truncf %50 : vector<8x8xf32> to vector<8x8xbf16>
    %cst_15 = arith.constant dense<0.000000e+00> : vector<8x32xf32>
    %54 = tpu.matmul %53, %4, %cst_15 {dimension_numbers = #tpu.dot_dimension_numbers<[1], [0], [0], [1], [0, 0, 1, 1], [], []>} : vector<8x8xbf16>, vector<8x32xbf16>, vector<8x32xf32> -> vector<8x32xf32>
    %55 = tpu.reciprocal %52 {approx = true} : vector<8x1xf32> -> vector<8x1xf32>
    %56 = vector.broadcast %55 : vector<8x1xf32> to vector<8x32xf32>
    %57 = arith.mulf %54, %56 : vector<8x32xf32>
    %c0_16 = arith.constant 0 : index
    %c0_17 = arith.constant 0 : index
    %c0_18 = arith.constant 0 : index
    %58 = vector.load %arg6[%c0_16, %c0_17, %c0_18] : memref<1x8x32xf32, #tpu.memory_space<vmem>>, vector<1x8x32xf32>
    %59 = vector.shape_cast %58 : vector<1x8x32xf32> to vector<8x32xf32>
    %60 = vector.shape_cast %57 : vector<8x32xf32> to vector<1x8x32xf32>
    tpu.vector_store %arg6[%c0_16, %c0_17, %c0_18], %60 {strides = array<i32>} : memref<1x8x32xf32, #tpu.memory_space<vmem>>, vector<1x8x32xf32>,
    return
  }
  func.func @transform_0(%arg0: i32, %arg1: i32) -> (i32, i32, i32) {
    %c0_i32 = arith.constant 0 : i32
    %c0_i32_0 = arith.constant 0 : i32
    return %arg0, %arg1, %c0_i32 : i32, i32, i32
  }
  func.func @transform_1(%arg0: i32, %arg1: i32) -> (i32, i32, i32) {
    %c0_i32 = arith.constant 0 : i32
    %c0_i32_0 = arith.constant 0 : i32
    %c0_i32_1 = arith.constant 0 : i32
    return %arg0, %c0_i32, %c0_i32_0 : i32, i32, i32
  }
  func.func @transform_2(%arg0: i32, %arg1: i32) -> (i32, i32, i32) {
    %c0_i32 = arith.constant 0 : i32
    %c0_i32_0 = arith.constant 0 : i32
    return %arg0, %arg1, %c0_i32 : i32, i32, i32
  }
  func.func @transform_3(%arg0: i32, %arg1: i32) -> (i32, i32) {
    %c0_i32 = arith.constant 0 : i32
    %c0_i32_0 = arith.constant 0 : i32
    %c0_i32_1 = arith.constant 0 : i32
    return %c0_i32, %c0_i32_0 : i32, i32
  }
  func.func @transform_4(%arg0: i32, %arg1: i32) -> (i32, i32, i32) {
    %c0_i32 = arith.constant 0 : i32
    %c0_i32_0 = arith.constant 0 : i32
    return %arg0, %arg1, %c0_i32 : i32, i32, i32
  }
}

</mosaic_0001>

<llo_original>
// kernel: tpu_custom_call.1
$region0: #{tpu_custom_call.1}
  #allocation0 [shape = 'u32[]', space=smem, size = 0x4, offset = 0x4, fixed_abs, tag = 'smem constant byte address 0x4 - core index']
  #allocation1 [shape = 'u32[144,128]{1,0:T(1,128)}', space=vmem, size = 0x12000, scoped, tag = 'internal scratch']
  %s0 = inlined_call_operand.hbm [shape: f32[2,8,32], index: 0, kind: input, shape index: {}]
  %s1 = inlined_call_operand.hbm [shape: f32[2,8,32], index: 1, kind: input, shape index: {}]
  %s2 = inlined_call_operand.hbm [shape: s8[2,8,8], index: 2, kind: input, shape index: {}]
  %s3 = inlined_call_operand.vmem [shape: f32[4,32], index: 3, kind: input, shape index: {}]
  %s4 = inlined_call_operand.hbm [shape: f32[2,8,32], index: 4, kind: output, shape index: {}]
  %s5 = sld [smem:[#allocation0]]
  $region61: #{tpu_custom_call.1} parent=0
    _
  %s7 = ssub.s32 1, %s5
  %s8 = scalar_select 0, %s7, %s5
  $region1: #{tpu_custom_call.1} parent=0
    #allocation2 [shape = 'u8[8192]{0}', space=vmem, size = 0x2000, scoped, tag = 'input window, operand 0']
    #allocation3 [shape = 's32[2]{0}', space=sflag, size = 0x8, scoped, tag = 'scoped memory for tpu_custom_call.1']
    #allocation4 [shape = 's32[2]{0}', space=sflag, size = 0x8, scoped, tag = 'scoped memory for tpu_custom_call.1']
    #allocation5 [shape = 'u8[8192]{0}', space=vmem, size = 0x2000, scoped, tag = 'input window, operand 1']
    #allocation6 [shape = 's32[2]{0}', space=sflag, size = 0x8, scoped, tag = 'scoped memory for tpu_custom_call.1']
    #allocation7 [shape = 'u8[2048]{0}', space=vmem, size = 0x800, scoped, tag = 'input window, operand 2']
    #allocation8 [shape = 'u8[8192]{0}', space=vmem, size = 0x2000, scoped, tag = 'output window, operand 0']
    %9 = vsyncpa [#allocation3], 0
    %s10 = scalar_lea.sflag [#allocation3], 1
    %11 = vsyncpa %s10, 0
    %12 = vsyncpa [#allocation6], 0
    %s13 = scalar_lea.sflag [#allocation6], 1
    %14 = vsyncpa %s13, 0
    %15 = vsyncpa [#allocation4], 0
    %s16 = scalar_lea.sflag [#allocation4], 1
    %17 = vsyncpa %s16, 0
    loop: start=0, step=1, limit=4
    $region2: #{tpu_custom_call.1} parent=1 // loop_pre_header
      _
    $region3: #{tpu_custom_call.1} parent=1 // loop_header
      %s19 = sphi 0, %s23
      %p20 = scmp.ge.s32.totalorder %s19, 4
      %s26 = sphi 0, %s38
      %s27 = sphi 0, %s34
      %s28 = sphi 0, %s26
      %s29 = sphi 0, %s27
      %s30 = sphi 0, %s28
      %s31 = sphi 0, %s29
      %s43 = sphi 0, %s45
      %s46 = sphi 0, %s43
      %s47 = sphi 0, %s46
      %s63 = sphi 0, %s47
      %s69 = sphi 0, %s71
      %s72 = sphi 0, %s69
      %s73 = sphi 0, %s72
      %s89 = sphi 0, %s73
      %s97 = sphi 0, %s99
      %s100 = sphi 0, %s97
      %s101 = sphi 0, %s100
      %s117 = sphi 0, %s101
      %s121 = sphi 0, %s121
      %s123 = sphi 0, %s121
      %s124 = sphi 0, %s123
      %s138 = sphi 0, %s124
      %s146 = sphi 0, %s148
      %s149 = sphi 0, %s146
      %s150 = sphi 0, %s149
      %s166 = sphi 0, %s150
    $region4: #{tpu_custom_call.1} parent=1 // loop_header_branch
      %22 = sbr.rel (%p20) target = $region8
    $region5: #{tpu_custom_call.1} parent=1 // loop_body
      %s24 = ssub.s32 %s19, 1
      %s25 = ssub.s32 %s19, 2
      %s32 = sadd.s32 1, %s27
      %p33 = scmp.ge.s32.totalorder %s32, 1
      %s34 = scalar_select %p33, 0, %s32
      %s35 = sadd.s32 1, %s26
      %s36 = scalar_select %p33, %s35, %s26
      %p37 = scmp.ge.s32.totalorder %s36, 2
      %s38 = scalar_select %p37, 0, %s36
      %s39 = ssub.s32 %s26, %s38
      %s40 = ssub.s32 %s27, %s34
      %s41 = sor.u32 %s39, %s40
      %p42 = scmp.eq.s32.totalorder %s41, 0
      %s44 = sadd.s32 %s43, 1
      %s45 = scalar_select %p42, %s43, %s44
      %p48 = pneg %p42
      %p49 = scmp.eq.s32.totalorder %s19, 1
      %p50 = por %p48, %p49
      %p51 = scmp.ne.s32.totalorder %s43, %s46
      %p52 = scmp.eq.s32.totalorder %s19, 0
      %p53 = por %p51, %p52
      %p54 = scmp.ne.s32.totalorder %s43, %s46
      %p55 = scmp.eq.s32.totalorder %s24, 1
      %p56 = por %p54, %p55
      %p57 = scmp.ne.s32.totalorder %s46, %s47
      %p58 = scmp.eq.s32.totalorder %s24, 0
      %p59 = por %p57, %p58
      %p60 = scmp.ne.s32.totalorder %s46, %s47
      %p61 = scmp.eq.s32.totalorder %s25, 1
      %p62 = por %p60, %p61
      %p64 = scmp.ne.s32.totalorder %s47, %s63
      %p65 = scmp.eq.s32.totalorder %s25, 0
      %p66 = por %p64, %p65
      %s67 = ssub.s32 %s26, %s38
      %p68 = scmp.eq.s32.totalorder %s67, 0
      %s70 = sadd.s32 %s69, 1
      %s71 = scalar_select %p68, %s69, %s70
      %p74 = pneg %p68
      %p75 = scmp.eq.s32.totalorder %s19, 1
      %p76 = por %p74, %p75
      %p77 = scmp.ne.s32.totalorder %s69, %s72
      %p78 = scmp.eq.s32.totalorder %s19, 0
      %p79 = por %p77, %p78
      %p80 = scmp.ne.s32.totalorder %s69, %s72
      %p81 = scmp.eq.s32.totalorder %s24, 1
      %p82 = por %p80, %p81
      %p83 = scmp.ne.s32.totalorder %s72, %s73
      %p84 = scmp.eq.s32.totalorder %s24, 0
      %p85 = por %p83, %p84
      %p86 = scmp.ne.s32.totalorder %s72, %s73
      %p87 = scmp.eq.s32.totalorder %s25, 1
      %p88 = por %p86, %p87
      %p90 = scmp.ne.s32.totalorder %s73, %s89
      %p91 = scmp.eq.s32.totalorder %s25, 0
      %p92 = por %p90, %p91
      %s93 = ssub.s32 %s26, %s38
      %s94 = ssub.s32 %s27, %s34
      %s95 = sor.u32 %s93, %s94
      %p96 = scmp.eq.s32.totalorder %s95, 0
      %s98 = sadd.s32 %s97, 1
      %s99 = scalar_select %p96, %s97, %s98
      %p102 = pneg %p96
      %p103 = scmp.eq.s32.totalorder %s19, 1
      %p104 = por %p102, %p103
      %p105 = scmp.ne.s32.totalorder %s97, %s100
      %p106 = scmp.eq.s32.totalorder %s19, 0
      %p107 = por %p105, %p106
      %p108 = scmp.ne.s32.totalorder %s97, %s100
      %p109 = scmp.eq.s32.totalorder %s24, 1
      %p110 = por %p108, %p109
      %p111 = scmp.ne.s32.totalorder %s100, %s101
      %p112 = scmp.eq.s32.totalorder %s24, 0
      %p113 = por %p111, %p112
      %p114 = scmp.ne.s32.totalorder %s100, %s101
      %p115 = scmp.eq.s32.totalorder %s25, 1
      %p116 = por %p114, %p115
      %p118 = scmp.ne.s32.totalorder %s101, %s117
      %p119 = scmp.eq.s32.totalorder %s25, 0
      %p120 = por %p118, %p119
      %s122 = sadd.s32 %s121, 1
      %p125 = scmp.eq.s32.totalorder %s19, 1
      %p126 = scmp.ne.s32.totalorder %s121, %s123
      %p127 = scmp.eq.s32.totalorder %s19, 0
      %p128 = por %p126, %p127
      %p129 = scmp.ne.s32.totalorder %s121, %s123
      %p130 = scmp.eq.s32.totalorder %s24, 1
      %p131 = por %p129, %p130
      %p132 = scmp.ne.s32.totalorder %s123, %s124
      %p133 = scmp.eq.s32.totalorder %s24, 0
      %p134 = por %p132, %p133
      %p135 = scmp.ne.s32.totalorder %s123, %s124
      %p136 = scmp.eq.s32.totalorder %s25, 1
      %p137 = por %p135, %p136
      %p139 = scmp.ne.s32.totalorder %s124, %s138
      %p140 = scmp.eq.s32.totalorder %s25, 0
      %p141 = por %p139, %p140
      %s142 = ssub.s32 %s26, %s38
      %s143 = ssub.s32 %s27, %s34
      %s144 = sor.u32 %s142, %s143
      %p145 = scmp.eq.s32.totalorder %s144, 0
      %s147 = sadd.s32 %s146, 1
      %s148 = scalar_select %p145, %s146, %s147
      %p151 = pneg %p145
      %p152 = scmp.eq.s32.totalorder %s19, 1
      %p153 = por %p151, %p152
      %p154 = scmp.ne.s32.totalorder %s146, %s149
      %p155 = scmp.eq.s32.totalorder %s19, 0
      %p156 = por %p154, %p155
      %p157 = scmp.ne.s32.totalorder %s146, %s149
      %p158 = scmp.eq.s32.totalorder %s24, 1
      %p159 = por %p157, %p158
      %p160 = scmp.ne.s32.totalorder %s149, %s150
      %p161 = scmp.eq.s32.totalorder %s24, 0
      %p162 = por %p160, %p161
      %p163 = scmp.ne.s32.totalorder %s149, %s150
      %p164 = scmp.eq.s32.totalorder %s25, 1
      %p165 = por %p163, %p164
      %p167 = scmp.ne.s32.totalorder %s150, %s166
      %p168 = scmp.eq.s32.totalorder %s25, 0
      %p169 = por %p167, %p168
      %p170 = scmp.le.s32.totalorder 1, %s19
      %p171 = scmp.lt.s32.totalorder %s19, 3
      %p172 = pnand %p170, %p171
      %p173 = pneg %p172
      // Predicated region
      $region9: #{tpu_custom_call.1} parent=5 // pred_check
        _
      $region10: #{tpu_custom_call.1} parent=5 // pred_check_branch
        %175 = sbr.rel (%p172) target = $region12
      $region11: #{tpu_custom_call.1} parent=5 // pred_region
        %s176 = ssub.s32 %s19, 1
        // Predicated region
        $region13: #{tpu_custom_call.1} parent=11 // pred_check
          %p177 = pneg %p134
        $region14: #{tpu_custom_call.1} parent=11 // pred_check_branch
          %179 = sbr.rel (%p177) target = $region16
        $region15: #{tpu_custom_call.1} parent=11 // pred_region
          _
        $region16: #{tpu_custom_call.1} parent=11 // pred_fallthru
          _
      $region12: #{tpu_custom_call.1} parent=5 // pred_fallthru
        _
      %p180 = scmp.lt.s32.totalorder %s19, 2
      // Predicated region
      $region17: #{tpu_custom_call.1} parent=5 // pred_check
        %p181 = pneg %p180
      $region18: #{tpu_custom_call.1} parent=5 // pred_check_branch
        %183 = sbr.rel (%p181) target = $region20
      $region19: #{tpu_custom_call.1} parent=5 // pred_region
        // Predicated region
        $region21: #{tpu_custom_call.1} parent=19 // pred_check
          %p184 = pneg %p53
        $region22: #{tpu_custom_call.1} parent=19 // pred_check_branch
          %186 = sbr.rel (%p184) target = $region24
        $region23: #{tpu_custom_call.1} parent=19 // pred_region
          %s187 = sand.u32 %s43, 1
          %s188 = scalar_lea.sflag [#allocation3], %s187
          %s189 = sand.u32 %s43, 1
          %s190 = smul.addr %s189, 8
          %s191 = scalar_lea.vmem [#allocation2], %s190
          %s193 = ssub.s32 128, 128
          %194 = vsyncadd %s188, %s193
          %s195 = sadd.s32 %s27, %s26
          %s196 = smul.addr %s195, 128
          %s197 = scalar_lea.hbm %s0, %s196
          %s199 = sshll.u32 %s191, 4
          %s200 = int_to_ptr.vmem [resolvable:$true] %s199
          %202 = dma.hbm_to_vmem [thread:$0]  %s197, 128, %s200, %s188
        $region24: #{tpu_custom_call.1} parent=19 // pred_fallthru
          _
        // Predicated region
        $region25: #{tpu_custom_call.1} parent=19 // pred_check
          %p203 = pneg %p79
        $region26: #{tpu_custom_call.1} parent=19 // pred_check_branch
          %205 = sbr.rel (%p203) target = $region28
        $region27: #{tpu_custom_call.1} parent=19 // pred_region
          %s206 = sand.u32 %s19, 1
          %s207 = scalar_lea.sflag [#allocation6], %s206
          %s208 = sand.u32 %s69, 1
          %s209 = smul.addr %s208, 8
          %s210 = scalar_lea.vmem [#allocation5], %s209
          %s212 = ssub.s32 128, 128
          %213 = vsyncadd %s207, %s212
          %s214 = smul.addr %s26, 128
          %s215 = scalar_lea.hbm %s1, %s214
          %s217 = sshll.u32 %s210, 4
          %s218 = int_to_ptr.vmem [resolvable:$true] %s217
          %220 = dma.hbm_to_vmem [thread:$0]  %s215, 128, %s218, %s207
        $region28: #{tpu_custom_call.1} parent=19 // pred_fallthru
          _
        // Predicated region
        $region29: #{tpu_custom_call.1} parent=19 // pred_check
          %p221 = pneg %p107
        $region30: #{tpu_custom_call.1} parent=19 // pred_check_branch
          %223 = sbr.rel (%p221) target = $region32
        $region31: #{tpu_custom_call.1} parent=19 // pred_region
          %s224 = sand.u32 %s19, 1
          %s225 = scalar_lea.sflag [#allocation6], %s224
          %s226 = sand.u32 %s97, 1
          %s227 = smul.addr %s226, 2
          %s228 = scalar_lea.vmem [#allocation7], %s227
          %s230 = ssub.s32 32, 32
          %231 = vsyncadd %s225, %s230
          %s232 = sadd.s32 %s27, %s26
          %s233 = smul.addr %s232, 32
          %s234 = scalar_lea.hbm %s2, %s233
          %s236 = sshll.u32 %s228, 4
          %s237 = int_to_ptr.vmem [resolvable:$true] %s236
          %239 = dma.hbm_to_vmem [thread:$0]  %s234, 32, %s237, %s225
        $region32: #{tpu_custom_call.1} parent=19 // pred_fallthru
          _
      $region20: #{tpu_custom_call.1} parent=5 // pred_fallthru
        _
      %p240 = scmp.le.s32.totalorder 1, %s19
      %p241 = scmp.lt.s32.totalorder %s19, 3
      %p242 = pnand %p240, %p241
      %p243 = pneg %p242
      // Predicated region
      $region33: #{tpu_custom_call.1} parent=5 // pred_check
        _
      $region34: #{tpu_custom_call.1} parent=5 // pred_check_branch
        %245 = sbr.rel (%p242) target = $region36
      $region35: #{tpu_custom_call.1} parent=5 // pred_region
        %s246 = ssub.s32 %s19, 1
        %s247 = sand.u32 %s46, 1
        %s248 = scalar_lea.sflag [#allocation3], %s247
        %s249 = sand.u32 %s46, 1
        %s250 = smul.addr %s249, 8
        %s251 = scalar_lea.vmem [#allocation2], %s250
        // Predicated region
        $region37: #{tpu_custom_call.1} parent=35 // pred_check
          %p252 = pneg %p59
        $region38: #{tpu_custom_call.1} parent=35 // pred_check_branch
          %254 = sbr.rel (%p252) target = $region40
        $region39: #{tpu_custom_call.1} parent=35 // pred_region
          %255 = dma.done %s248, 128
        $region40: #{tpu_custom_call.1} parent=35 // pred_fallthru
          _
        %s256 = sand.u32 %s24, 1
        %s257 = scalar_lea.sflag [#allocation6], %s256
        %s258 = sand.u32 %s72, 1
        %s259 = smul.addr %s258, 8
        %s260 = scalar_lea.vmem [#allocation5], %s259
        // Predicated region
        $region41: #{tpu_custom_call.1} parent=35 // pred_check
          %p261 = pneg %p85
        $region42: #{tpu_custom_call.1} parent=35 // pred_check_branch
          %263 = sbr.rel (%p261) target = $region44
        $region43: #{tpu_custom_call.1} parent=35 // pred_region
          %264 = dma.done %s257, 128
        $region44: #{tpu_custom_call.1} parent=35 // pred_fallthru
          _
        %s265 = sand.u32 %s24, 1
        %s266 = scalar_lea.sflag [#allocation6], %s265
        %s267 = sand.u32 %s100, 1
        %s268 = smul.addr %s267, 2
        %s269 = scalar_lea.vmem [#allocation7], %s268
        // Predicated region
        $region45: #{tpu_custom_call.1} parent=35 // pred_check
          %p270 = pneg %p113
        $region46: #{tpu_custom_call.1} parent=35 // pred_check_branch
          %272 = sbr.rel (%p270) target = $region48
        $region47: #{tpu_custom_call.1} parent=35 // pred_region
          %273 = dma.done %s266, 32
        $region48: #{tpu_custom_call.1} parent=35 // pred_fallthru
          _
        %s274 = sand.u32 %s46, 1
        %s275 = scalar_lea.sflag [#allocation3], %s274
        %s276 = sand.u32 %s46, 1
        %s277 = smul.addr %s276, 8
        %s278 = scalar_lea.vmem [#allocation2], %s277
        %p279 = pneg %p59
        %p280 = pneg %p56
        %s281 = sand.u32 %s24, 1
        %s282 = scalar_lea.sflag [#allocation6], %s281
        %s283 = sand.u32 %s72, 1
        %s284 = smul.addr %s283, 8
        %s285 = scalar_lea.vmem [#allocation5], %s284
        %p286 = pneg %p85
        %p287 = pneg %p82
        %s288 = sand.u32 %s24, 1
        %s289 = scalar_lea.sflag [#allocation6], %s288
        %s290 = sand.u32 %s100, 1
        %s291 = smul.addr %s290, 2
        %s292 = scalar_lea.vmem [#allocation7], %s291
        %p293 = pneg %p113
        %p294 = pneg %p110
        %p295 = pneg %p134
        %p296 = pneg %p131
        %p297 = pneg %p162
        %p298 = pneg %p159
        %s299 = sand.u32 %s149, 1
        %s300 = scalar_lea.sflag [#allocation4], %s299
        %s301 = sand.u32 %s149, 1
        %s302 = smul.addr %s301, 8
        %s303 = scalar_lea.vmem [#allocation8], %s302
        %v305 = vld [vmem:[%s251] sm:$0xff]
        %v306 = vld [vmem:[%s260] sm:$0xff]
        %v307 = vpack.c.bf16 %v306, %v306
        %v308 = vld [vmem:[%s269] sm:$0x3]
        %v309 = vunpack.c.0.s8 %v308
        %v310 = vld [vmem:[%s3] sm:$0xf]
        %v311 = vlaneseq
        %v312 = vshrl.u32 %v311, 7
        %v313 = vsub.s32 0, %v312
        %v314 = vrot.slane %v310, %v313
        %v315 = vmul.f32 %v305, %v314
        %v316 = vlaneseq
        %v317 = vshrl.u32 %v316, 7
        %v318 = vsub.s32 1, %v317
        %v319 = vrot.slane %v310, %v318
        %v320 = vmul.f32 %v305, %v319
        %v321 = vlaneseq
        %v322 = vshrl.u32 %v321, 7
        %v323 = vsub.s32 2, %v322
        %v324 = vrot.slane %v310, %v323
        %v325 = vmul.f32 %v305, %v324
        %v326 = vlaneseq
        %v327 = vshrl.u32 %v326, 7
        %v328 = vsub.s32 3, %v327
        %v329 = vrot.slane %v310, %v328
        %v330 = vmul.f32 %v305, %v329
        %v331 = vpack.c.bf16 %v320, %v315
        %v332 = vpack.c.bf16 %v330, %v325
        %vm333 = vcmask 261120
        %v335 = vsel %vm333, %v331, 0
        %v338 = vsel %vm333, %v332, 0
        %v341 = vsel %vm333, %v307, 0
        %343 = vmatprep.subr.bf16.mxu0 0
        %344 = vmatpush1.bf16.xpose.msra.mxu0 0
        %345 = vmatprep.subr.bf16.mxu0 0
        %346 = vmatpush1.bf16.xpose.msra.mxu0 0
        %347 = vmatprep.subr.bf16.mxu0 0
        %348 = vmatpush1.bf16.xpose.msra.mxu0 0
        %349 = vmatprep.subr.bf16.mxu0 0
        %350 = vmatpush1.bf16.xpose.msra.mxu0 0
        %351 = vmatprep.subr.bf16.mxu0 0
        %352 = vmatpush1.bf16.xpose.msra.mxu0 0
        %353 = vmatprep.subr.bf16.mxu0 0
        %354 = vmatpush1.bf16.xpose.msra.mxu0 0
        %355 = vmatprep.subr.bf16.mxu0 0
        %356 = vmatpush1.bf16.xpose.msra.mxu0 0
        %357 = vmatprep.subr.bf16.mxu0 0
        %358 = vmatpush1.bf16.xpose.msra.mxu0 %v341
        %359 = vmatprep.subr.bf16.mxu0 0
        %360 = vmatpush2.bf16.xpose.msra.mxu0 0
        %361 = vmatprep.subr.bf16.mxu0 0
        %362 = vmatpush2.bf16.xpose.msra.mxu0 0
        %363 = vmatprep.subr.bf16.mxu0 0
        %364 = vmatpush2.bf16.xpose.msra.mxu0 0
        %365 = vmatprep.subr.bf16.mxu0 0
        %366 = vmatpush2.bf16.xpose.msra.mxu0 0
        %367 = vmatprep.subr.bf16.mxu0 0
        %368 = vmatpush2.bf16.xpose.msra.mxu0 0
        %369 = vmatprep.subr.bf16.mxu0 0
        %370 = vmatpush2.bf16.xpose.msra.mxu0 0
        %371 = vmatprep.subr.bf16.mxu0 0
        %372 = vmatpush2.bf16.xpose.msra.mxu0 0
        %373 = vmatprep.subr.bf16.mxu0 0
        %374 = vmatpush2.bf16.xpose.msra.mxu0 0
        %375 = vmatprep.mubr.bf16.mxu0 0
        %376 = vmatmul.mubr.bf16.gmra.mxu0 %v335
        %v377 = vpop.f32.mrf.mxu0
        %v378 = vadd.f32 0.0, %v377
        %v379 = vpop.f32.mrf.mxu0
        %v380 = vpop.f32.mrf.mxu0
        %v381 = vadd.f32 0.0, %v380
        %v382 = vpop.f32.mrf.mxu0
        %383 = vmatprep.mubr.bf16.mxu0 0
        %384 = vmatmul.mubr.bf16.gmra.mxu0 %v338
        %v385 = vpop.f32.mrf.mxu0
        %v386 = vadd.f32 0.0, %v385
        %v387 = vpop.f32.mrf.mxu0
        %v388 = vpop.f32.mrf.mxu0
        %v389 = vadd.f32 0.0, %v388
        %v390 = vpop.f32.mrf.mxu0
        %391 = vdwg.mxu0
        %vm392 = vcmp.eq.s32.totalorder %v309, 1
        %v393 = vsel %vm392, %v378, -9e+15
        %vm394 = vcmp.eq.s32.totalorder %v309, 2
        %v395 = vsel %vm394, %v381, %v393
        %vm396 = vcmp.eq.s32.totalorder %v309, 3
        %v397 = vsel %vm396, %v386, %v395
        %vm398 = vcmp.eq.s32.totalorder %v309, 4
        %v399 = vsel %vm398, %v389, %v397
        %vm400 = vcmp.gt.f32.partialorder %v399, 0.0
        %v401 = vmul.f32 %v399, 0.2
        %v402 = vsel %vm400, %v399, %v401
        %vm403 = vcmask 64512
        %v404 = vsel %vm403, %v402, -inf
        %405 = vmax.xlane.f32.xlu0 %v404
        %v406 = vpop.xlane.xlu0 %405
        %v407 = vsub.f32 %v402, %v406
        %v408 = vmul.f32 %v407, 1.442695
        %v409 = vpow.pop %v408
        %v410 = vsel %vm403, %v409, 0.0
        %411 = vadd.xlane.f32.xlu0 %v410
        %v412 = vpop.xlane.xlu0 %411
        %v413 = vpack.c.bf16 %v409, %v409
        %v415 = vsel %vm403, %v413, 0
        %vm417 = vcmask 1043456
        %v418 = vsel %vm417, %v307, 0
        %420 = vmatprep.subr.bf16.mxu0 0
        %421 = vmatpush1.bf16.msra.mxu0 0
        %422 = vmatprep.subr.bf16.mxu0 0
        %423 = vmatpush1.bf16.msra.mxu0 0
        %424 = vmatprep.subr.bf16.mxu0 0
        %425 = vmatpush1.bf16.msra.mxu0 0
        %426 = vmatprep.subr.bf16.mxu0 0
        %427 = vmatpush1.bf16.msra.mxu0 0
        %428 = vmatprep.subr.bf16.mxu0 0
        %429 = vmatpush1.bf16.msra.mxu0 0
        %430 = vmatprep.subr.bf16.mxu0 0
        %431 = vmatpush1.bf16.msra.mxu0 0
        %432 = vmatprep.subr.bf16.mxu0 0
        %433 = vmatpush1.bf16.msra.mxu0 0
        %434 = vmatprep.subr.bf16.mxu0 0
        %435 = vmatpush1.bf16.msra.mxu0 %v418
        %436 = vmatprep.subr.bf16.mxu0 0
        %437 = vmatpush2.bf16.msra.mxu0 0
        %438 = vmatprep.subr.bf16.mxu0 0
        %439 = vmatpush2.bf16.msra.mxu0 0
        %440 = vmatprep.subr.bf16.mxu0 0
        %441 = vmatpush2.bf16.msra.mxu0 0
        %442 = vmatprep.subr.bf16.mxu0 0
        %443 = vmatpush2.bf16.msra.mxu0 0
        %444 = vmatprep.subr.bf16.mxu0 0
        %445 = vmatpush2.bf16.msra.mxu0 0
        %446 = vmatprep.subr.bf16.mxu0 0
        %447 = vmatpush2.bf16.msra.mxu0 0
        %448 = vmatprep.subr.bf16.mxu0 0
        %449 = vmatpush2.bf16.msra.mxu0 0
        %450 = vmatprep.subr.bf16.mxu0 0
        %451 = vmatpush2.bf16.msra.mxu0 0
        %452 = vmatprep.mubr.bf16.mxu0 0
        %453 = vmatmul.mubr.bf16.gmra.mxu0 %v415
        %v454 = vpop.f32.mrf.mxu0
        %v455 = vadd.f32 0.0, %v454
        %v456 = vpop.f32.mrf.mxu0
        %v457 = vpop.f32.mrf.mxu0
        %v458 = vpop.f32.mrf.mxu0
        %459 = vdwg.mxu0
        %v460 = vrcp.pop %v412
        %v461 = vmul.f32 %v455, %v460
        %462 = vst.msk [vmem:[%s303] sm:$0xff] %vm333, %v461
        %s463 = sand.u32 %s149, 1
        %s464 = scalar_lea.sflag [#allocation4], %s463
        %s465 = sand.u32 %s149, 1
        %s466 = smul.addr %s465, 8
        %s467 = scalar_lea.vmem [#allocation8], %s466
        // Predicated region
        $region49: #{tpu_custom_call.1} parent=35 // pred_check
          %p468 = pneg %p159
        $region50: #{tpu_custom_call.1} parent=35 // pred_check_branch
          %470 = sbr.rel (%p468) target = $region52
        $region51: #{tpu_custom_call.1} parent=35 // pred_region
          %s472 = ssub.s32 128, 128
          %473 = vsyncadd %s464, %s472
          %s474 = sadd.s32 %s29, %s28
          %s475 = smul.addr %s474, 128
          %s476 = scalar_lea.hbm %s4, %s475
          %s478 = sshll.u32 %s467, 4
          %s479 = int_to_ptr.vmem [resolvable:$true] %s478
          %481 = dma.vmem_to_hbm [thread:$0]  %s479, 128, %s476, %s464
        $region52: #{tpu_custom_call.1} parent=35 // pred_fallthru
          _
      $region36: #{tpu_custom_call.1} parent=5 // pred_fallthru
        _
      %p482 = scmp.le.s32.totalorder 2, %s19
      // Predicated region
      $region53: #{tpu_custom_call.1} parent=5 // pred_check
        %p483 = pneg %p482
      $region54: #{tpu_custom_call.1} parent=5 // pred_check_branch
        %485 = sbr.rel (%p483) target = $region56
      $region55: #{tpu_custom_call.1} parent=5 // pred_region
        %s486 = ssub.s32 %s19, 2
        // Predicated region
        $region57: #{tpu_custom_call.1} parent=55 // pred_check
          %p487 = pneg %p165
        $region58: #{tpu_custom_call.1} parent=55 // pred_check_branch
          %489 = sbr.rel (%p487) target = $region60
        $region59: #{tpu_custom_call.1} parent=55 // pred_region
          %s490 = sand.u32 %s150, 1
          %s491 = scalar_lea.sflag [#allocation4], %s490
          %s492 = sand.u32 %s150, 1
          %s493 = smul.addr %s492, 8
          %s494 = scalar_lea.vmem [#allocation8], %s493
          %495 = dma.done %s491, 128
        $region60: #{tpu_custom_call.1} parent=55 // pred_fallthru
          _
      $region56: #{tpu_custom_call.1} parent=5 // pred_fallthru
        _
    $region6: #{tpu_custom_call.1} parent=1 // loop_footer
      %s23 = sadd.s32 1, %s19
    $region7: #{tpu_custom_call.1} parent=1 // loop_footer_branch
      %18 = sbr.rel target = $region3
    $region8: #{tpu_custom_call.1} parent=1 // loop_exit
      _
    %496 = vsyncpa [#allocation3], 1
    %s497 = scalar_lea.sflag [#allocation3], 1
    %498 = vsyncpa %s497, 1
    %499 = vsyncpa [#allocation6], 1
    %s500 = scalar_lea.sflag [#allocation6], 1
    %501 = vsyncpa %s500, 1
    %502 = vsyncpa [#allocation4], 1
    %s503 = scalar_lea.sflag [#allocation4], 1
    %504 = vsyncpa %s503, 1

</llo_original>
